<compile_context>
chip_gen: v7x
topology: tpu7x:2x2x1
jax: 0.10.0
libtpu: 0.0.40
codegen_flags: <defaults>
</compile_context>

<pallas_src>
import functools

import numpy as np

import jax
import jax.numpy as jnp
from jax.experimental import pallas as pl
from jax.experimental.pallas import tpu as pltpu


def _round_up(x, m):
    return ((x + m - 1) // m) * m


def _choose_tiles(N, C, H, W, Hp, Wp, num_streams, out_bytes, sublane,
                  budget_bytes=26 * 1024 * 1024, max_tile=1024):
    """Pick (TH_out, TH_in, n_tiles) for the row tiling.

    Tiled path: TH_out == TH_in == TH (multiple of `sublane`), sized so the
    double-buffered blocks (1 f32 input + num_streams outputs) stay within
    `budget_bytes` of VMEM.  Fallback for padded heights that cannot be
    sublane-tiled: one full-extent tile (input block = H rows, output = Hp).
    """
    if Hp % sublane != 0 or Hp < sublane:
        return Hp, H, 1                                   # single-tile fallback
    bytes_per_row = 2 * C * (4 * W + num_streams * out_bytes * Wp)  # 2x = dbl buffer
    th = budget_bytes // max(bytes_per_row, 1)
    th = max(sublane, min(th, max_tile, Hp))
    th = (th // sublane) * sublane
    n_tiles = pl.cdiv(Hp, th)
    # v7x: two TensorCores share the ("parallel","parallel") grid — keep at
    # least two grid points when the batch alone does not provide them.
    if N * n_tiles < 2 and Hp >= 2 * sublane:
        n_tiles = 2
    # Re-derive TH from the tile count so pad rows are absorbed into the last
    # real tile (ceil(Hp/TH) == ceil(H/TH) in the common case, so the input
    # block-index clamp never forces a redundant DMA).
    th = _round_up(pl.cdiv(Hp, n_tiles), sublane)
    n_tiles = pl.cdiv(Hp, th)
    return th, th, n_tiles


def _preprocess_kernel(img_ref, *out_refs, streams, H, need_row_mask):
    """Normalize (+ optional post-normalize channel flip) + zero-pad one tile.

    img_ref : (C, TH_in, W)   input row tile (batch dim squeezed)
    out_refs: S refs, each (C, TH_out, Wp)
    streams : tuple of (mean: tuple[float], inv_std: tuple[float], flip: bool)
    """
    C, TH_in, W = img_ref.shape
    _, TH_out, Wp = out_refs[0].shape
    pad_w = Wp - W
    pad_h = TH_out - TH_in          # > 0 only in the single-tile fallback

    if need_row_mask:
        t = pl.program_id(1)
        row = t * TH_in + jax.lax.broadcasted_iota(jnp.int32, (TH_in, 1), 0)
        row_ok = row < H            # (TH_in, 1): zeroes [H, Hp) / garbage rows

    # Hoisted zero fillers, shared by every channel / stream (broadcasts are
    # not CSE'd by JAX, so build them once).
    col_zeros = jnp.zeros((TH_in, pad_w), jnp.float32) if pad_w > 0 else None
    row_zeros = jnp.zeros((pad_h, Wp), jnp.float32) if pad_h > 0 else None

    for c_src in range(C):                                # static channel loop
        x_c = img_ref[c_src].astype(jnp.float32)          # one load, reused by all streams
        for s, (mean, inv_std, flip) in enumerate(streams):
            out_ref = out_refs[s]
            # Reference semantics: normalize first, then flip channels, i.e.
            # out[C-1-c] = (x[c] - mean[c]) * inv_std[c].
            c_dst = (C - 1 - c_src) if flip else c_src
            y = (x_c - mean[c_src]) * inv_std[c_src]       # mul, not div
            if need_row_mask:
                y = jnp.where(row_ok, y, 0.0)
            if pad_w > 0:        # fold the column pad into one lane-dense store
                y = jnp.concatenate([y, col_zeros], axis=1)
            if pad_h > 0:        # single-tile fallback: pad rows [H, Hp)
                y = jnp.concatenate([y, row_zeros], axis=0)
            out_ref[c_dst] = y.astype(out_ref.dtype)       # full-width store


def preprocess_images_pallas(images, streams, size_divisibility,
                             out_dtype=jnp.float32):
    """images: (N, C, H, W) float batch.

    streams: sequence of dicts {'pixel_mean': (C,), 'pixel_std': (C,),
    'flip': bool}.  Returns one (N, C, Hp, Wp) array per stream, where Hp/Wp
    are H/W rounded up to `size_divisibility` (ImageList.from_tensors,
    pad_value=0).  All streams share a single HBM read of `images`.
    """
    N, C, H, W = images.shape
    if size_divisibility > 1:
        Hp = _round_up(H, size_divisibility)
        Wp = _round_up(W, size_divisibility)
    else:
        Hp, Wp = H, W

    out_dtype = jnp.dtype(out_dtype)
    # Sub-32-bit outputs need 16/32-row sublane granularity on row tiles.
    sublane = {4: 8, 2: 16, 1: 32}.get(out_dtype.itemsize, 8)

    S = len(streams)
    TH_out, TH_in, n_tiles = _choose_tiles(N, C, H, W, Hp, Wp, S,
                                           out_dtype.itemsize, sublane)
    tiled = (TH_out == TH_in)
    need_row_mask = tiled and (n_tiles * TH_out != H)
    last_in_blk = max(pl.cdiv(H, TH_in) - 1, 0)

    # Bake per-stream constants (static model parameters) into the kernel.
    consts = []
    for st in streams:
        mean = tuple(np.asarray(st["pixel_mean"], np.float64).reshape(-1).tolist())
        inv = tuple((1.0 / np.asarray(st["pixel_std"], np.float64).reshape(-1)).tolist())
        consts.append((mean, inv, bool(st["flip"])))
    kernel = functools.partial(_preprocess_kernel, streams=tuple(consts),
                               H=H, need_row_mask=need_row_mask)

    img_spec = pl.BlockSpec(
        (None, C, TH_in, W),
        # Clamp so a (rare, tiny-image) pad-only tile never addresses an
        # out-of-range input block; for every real tile this is a no-op.
        lambda n, t: (n, 0, jnp.minimum(t, last_in_blk), 0))
    out_spec = pl.BlockSpec((None, C, TH_out, Wp), lambda n, t: (n, 0, t, 0))

    outs = pl.pallas_call(
        kernel,
        out_shape=tuple(jax.ShapeDtypeStruct((N, C, Hp, Wp), out_dtype)
                        for _ in range(S)),
        grid=(N, n_tiles),
        in_specs=[img_spec],
        out_specs=tuple(out_spec for _ in range(S)),
        compiler_params=pltpu.CompilerParams(
            dimension_semantics=("parallel", "parallel"),
            vmem_limit_bytes=32 * 1024 * 1024),
    )(images)

    if not isinstance(outs, (tuple, list)):
        outs = (outs,)
    return tuple(outs)


# ----------------------------------------------------------------------------
# RCNNKD module (JAX side).  Student/teacher are reduced to the pieces this
# module actually touches: pixel_mean / pixel_std / input_format /
# backbone.size_divisibility.
# ----------------------------------------------------------------------------
class RCNNKD:
    def __init__(self, *, student, teacher, kd_args):
        self.student = student
        self.teacher = teacher
        self.kd_args = kd_args

    def _student_stream(self):
        return {"pixel_mean": self.student["pixel_mean"],
                "pixel_std": self.student["pixel_std"],
                "flip": False}

    def _teacher_stream(self):
        s_fmt = self.student["input_format"]
        t_fmt = self.teacher["input_format"]
        if s_fmt != t_fmt:
            if not (s_fmt == "RGB" and t_fmt == "BGR"):
                raise NotImplementedError
            flip = True
        else:
            flip = False
        return {"pixel_mean": self.teacher["pixel_mean"],
                "pixel_std": self.teacher["pixel_std"],
                "flip": flip}

    def preprocess_image(self, images):
        (out,) = preprocess_images_pallas(
            images, [self._student_stream()],
            self.student["size_divisibility"])
        return out

    def preprocess_image_teacher(self, images):
        (out,) = preprocess_images_pallas(
            images, [self._teacher_stream()],
            self.student["size_divisibility"])  # padded to student's divisibility
        return out

    def preprocess_image_both(self, images):
        # Fused student + teacher preprocessing: one pallas_call, one HBM read
        # of the image batch, two normalized/padded outputs.
        return preprocess_images_pallas(
            images, [self._student_stream(), self._teacher_stream()],
            self.student["size_divisibility"])

    def forward(self, batched_inputs):
        # Base ("Vanilla") distiller defines no forward in the reference.
        raise NotImplementedError

    # TODO(synk): inference/visualize_training delegate to the full
    # GeneralizedRCNN student (backbone + RPN + ROI heads), which is an
    # external detectron2 model and out of scope for this module's kernel.


# ----------------------------------------------------------------------------
# Demo / smoke test
# ----------------------------------------------------------------------------
if __name__ == "__main__":
    key = jax.random.PRNGKey(0)

    # Small synthetic batch: 2 images, 3 channels, 16x16, pixel values ~[0,255].
    N, C, H, W = 2, 3, 16, 16
    images = jax.random.uniform(key, (N, C, H, W), jnp.float32,
                                minval=0.0, maxval=255.0)

    # Deterministic detectron2-style per-channel statistics.
    student = {
        "pixel_mean": jnp.array([123.675, 116.280, 103.530], jnp.float32),  # RGB
        "pixel_std": jnp.array([58.395, 57.120, 57.375], jnp.float32),
        "input_format": "RGB",
        "size_divisibility": 32,
    }
    teacher = {
        "pixel_mean": jnp.array([103.530, 116.280, 123.675], jnp.float32),  # BGR
        "pixel_std": jnp.array([1.0, 1.0, 1.0], jnp.float32),
        "input_format": "BGR",
        "size_divisibility": 32,
    }

    model = RCNNKD(student=student, teacher=teacher, kd_args={"TYPE": "Vanilla"})

    # Fused (single HBM read) path + the individual API-compatible paths.
    out_s_fused, out_t_fused = model.preprocess_image_both(images)
    out_student = model.preprocess_image(images)
    out_teacher = model.preprocess_image_teacher(images)
    jax.block_until_ready((out_s_fused, out_t_fused, out_student, out_teacher))

    # ---- pure-JAX reference check -------------------------------------------
    def ref_preprocess(imgs, mean, std, div, flip):
        x = (imgs - mean[None, :, None, None]) / std[None, :, None, None]
        if flip:                      # normalize-then-flip, per the reference
            x = x[:, ::-1, :, :]
        Hp = ((imgs.shape[2] + div - 1) // div) * div
        Wp = ((imgs.shape[3] + div - 1) // div) * div
        return jnp.pad(x, ((0, 0), (0, 0),
                           (0, Hp - imgs.shape[2]), (0, Wp - imgs.shape[3])))

    ref_s = ref_preprocess(images, student["pixel_mean"], student["pixel_std"],
                           student["size_divisibility"], False)
    ref_t = ref_preprocess(images, teacher["pixel_mean"], teacher["pixel_std"],
                           student["size_divisibility"], True)

    assert out_student.shape == (N, C, 32, 32)
    assert out_teacher.shape == (N, C, 32, 32)
    assert out_s_fused.shape == (N, C, 32, 32)
    assert out_t_fused.shape == (N, C, 32, 32)
    assert jnp.allclose(out_student, ref_s, atol=1e-4, rtol=1e-5)
    assert jnp.allclose(out_teacher, ref_t, atol=1e-4, rtol=1e-5)
    assert jnp.allclose(out_s_fused, ref_s, atol=1e-4, rtol=1e-5)
    assert jnp.allclose(out_t_fused, ref_t, atol=1e-4, rtol=1e-5)

    print("KERNEL_OK")
</pallas_src>

<mosaic_0001>
module attributes {stable_mosaic.version = 11 : i64} {
  func.func @_preprocess_kernel(%arg0: i32, %arg1: i32, %arg2: memref<1x3x32x16xf32, #tpu.memory_space<vmem>>, %arg3: memref<1x3x32x32xf32, #tpu.memory_space<vmem>>, %arg4: memref<1x3x32x32xf32, #tpu.memory_space<vmem>>) attributes {dimension_semantics = [#tpu.dimension_semantics<parallel>, #tpu.dimension_semantics<parallel>], iteration_bounds = array<i64: 2, 1>, scalar_prefetch = 0 : i64, scratch_operands = 0 : i64, tpu.core_type = #tpu.core_type<tc>, window_params = [{transform_indices = @transform_0, window_bounds = array<i64: 1, 3, 32, 16>}, {transform_indices = @transform_1, window_bounds = array<i64: 1, 3, 32, 32>}, {transform_indices = @transform_2, window_bounds = array<i64: 1, 3, 32, 32>}]} {
    %c32_i32 = arith.constant 32 : i32
    %0 = arith.muli %arg1, %c32_i32 : i32
    %1 = tpu.iota {dimensions = array<i32: 0>} : vector<32x1xi32>
    %2 = vector.broadcast %0 : i32 to vector<32x1xi32>
    %3 = arith.addi %2, %1 : vector<32x1xi32>
    %c16_i32 = arith.constant 16 : i32
    %4 = vector.broadcast %c16_i32 : i32 to vector<32x1xi32>
    %5 = arith.cmpi slt, %3, %4 : vector<32x1xi32>
    %cst = arith.constant 0.000000e+00 : f32
    %6 = vector.broadcast %cst : f32 to vector<32x16xf32>
    %c0 = arith.constant 0 : index
    %c0_0 = arith.constant 0 : index
    %c0_1 = arith.constant 0 : index
    %c0_2 = arith.constant 0 : index
    %7 = vector.load %arg2[%c0, %c0_0, %c0_1, %c0_2] : memref<1x3x32x16xf32, #tpu.memory_space<vmem>>, vector<1x1x32x16xf32>
    %8 = vector.shape_cast %7 : vector<1x1x32x16xf32> to vector<32x16xf32>
    %cst_3 = arith.constant 1.236750e+02 : f32
    %9 = vector.broadcast %cst_3 : f32 to vector<32x16xf32>
    %10 = arith.subf %8, %9 : vector<32x16xf32>
    %cst_4 = arith.constant 0.0171247534 : f32
    %11 = vector.broadcast %cst_4 : f32 to vector<32x16xf32>
    %12 = arith.mulf %10, %11 : vector<32x16xf32>
    %cst_5 = arith.constant 0.000000e+00 : f32
    %13 = vector.shape_cast %5 : vector<32x1xi1> to vector<32x1xi1>
    %14 = vector.broadcast %13 : vector<32x1xi1> to vector<32x16xi1>
    %15 = vector.broadcast %cst_5 : f32 to vector<32x16xf32>
    %16 = arith.select %14, %12, %15 : vector<32x16xi1>, vector<32x16xf32>
    %17 = tpu.concatenate %16, %6 in 1 : vector<32x16xf32>, vector<32x16xf32> -> vector<32x32xf32>
    %c0_6 = arith.constant 0 : index
    %c0_7 = arith.constant 0 : index
    %c0_8 = arith.constant 0 : index
    %c0_9 = arith.constant 0 : index
    %18 = vector.load %arg3[%c0_6, %c0_7, %c0_8, %c0_9] : memref<1x3x32x32xf32, #tpu.memory_space<vmem>>, vector<1x1x32x32xf32>
    %19 = vector.shape_cast %18 : vector<1x1x32x32xf32> to vector<32x32xf32>
    %20 = vector.shape_cast %17 : vector<32x32xf32> to vector<1x1x32x32xf32>
    tpu.vector_store %arg3[%c0_6, %c0_7, %c0_8, %c0_9], %20 {strides = array<i32>} : memref<1x3x32x32xf32, #tpu.memory_space<vmem>>, vector<1x1x32x32xf32>,
    %cst_10 = arith.constant 1.035300e+02 : f32
    %21 = vector.broadcast %cst_10 : f32 to vector<32x16xf32>
    %22 = arith.subf %8, %21 : vector<32x16xf32>
    %cst_11 = arith.constant 1.000000e+00 : f32
    %23 = vector.broadcast %cst_11 : f32 to vector<32x16xf32>
    %24 = arith.mulf %22, %23 : vector<32x16xf32>
    %cst_12 = arith.constant 0.000000e+00 : f32
    %25 = vector.shape_cast %5 : vector<32x1xi1> to vector<32x1xi1>
    %26 = vector.broadcast %25 : vector<32x1xi1> to vector<32x16xi1>
    %27 = vector.broadcast %cst_12 : f32 to vector<32x16xf32>
    %28 = arith.select %26, %24, %27 : vector<32x16xi1>, vector<32x16xf32>
    %29 = tpu.concatenate %28, %6 in 1 : vector<32x16xf32>, vector<32x16xf32> -> vector<32x32xf32>
    %c0_13 = arith.constant 0 : index
    %c2 = arith.constant 2 : index
    %c0_14 = arith.constant 0 : index
    %c0_15 = arith.constant 0 : index
    %30 = vector.load %arg4[%c0_13, %c2, %c0_14, %c0_15] : memref<1x3x32x32xf32, #tpu.memory_space<vmem>>, vector<1x1x32x32xf32>
    %31 = vector.shape_cast %30 : vector<1x1x32x32xf32> to vector<32x32xf32>
    %32 = vector.shape_cast %29 : vector<32x32xf32> to vector<1x1x32x32xf32>
    tpu.vector_store %arg4[%c0_13, %c2, %c0_14, %c0_15], %32 {strides = array<i32>} : memref<1x3x32x32xf32, #tpu.memory_space<vmem>>, vector<1x1x32x32xf32>,
    %c0_16 = arith.constant 0 : index
    %c1 = arith.constant 1 : index
    %c0_17 = arith.constant 0 : index
    %c0_18 = arith.constant 0 : index
    %33 = vector.load %arg2[%c0_16, %c1, %c0_17, %c0_18] : memref<1x3x32x16xf32, #tpu.memory_space<vmem>>, vector<1x1x32x16xf32>
    %34 = vector.shape_cast %33 : vector<1x1x32x16xf32> to vector<32x16xf32>
    %cst_19 = arith.constant 1.162800e+02 : f32
    %35 = vector.broadcast %cst_19 : f32 to vector<32x16xf32>
    %36 = arith.subf %34, %35 : vector<32x16xf32>
    %cst_20 = arith.constant 0.0175070036 : f32
    %37 = vector.broadcast %cst_20 : f32 to vector<32x16xf32>
    %38 = arith.mulf %36, %37 : vector<32x16xf32>
    %cst_21 = arith.constant 0.000000e+00 : f32
    %39 = vector.shape_cast %5 : vector<32x1xi1> to vector<32x1xi1>
    %40 = vector.broadcast %39 : vector<32x1xi1> to vector<32x16xi1>
    %41 = vector.broadcast %cst_21 : f32 to vector<32x16xf32>
    %42 = arith.select %40, %38, %41 : vector<32x16xi1>, vector<32x16xf32>
    %43 = tpu.concatenate %42, %6 in 1 : vector<32x16xf32>, vector<32x16xf32> -> vector<32x32xf32>
    %c0_22 = arith.constant 0 : index
    %c1_23 = arith.constant 1 : index
    %c0_24 = arith.constant 0 : index
    %c0_25 = arith.constant 0 : index
    %44 = vector.load %arg3[%c0_22, %c1_23, %c0_24, %c0_25] : memref<1x3x32x32xf32, #tpu.memory_space<vmem>>, vector<1x1x32x32xf32>
    %45 = vector.shape_cast %44 : vector<1x1x32x32xf32> to vector<32x32xf32>
    %46 = vector.shape_cast %43 : vector<32x32xf32> to vector<1x1x32x32xf32>
    tpu.vector_store %arg3[%c0_22, %c1_23, %c0_24, %c0_25], %46 {strides = array<i32>} : memref<1x3x32x32xf32, #tpu.memory_space<vmem>>, vector<1x1x32x32xf32>,
    %cst_26 = arith.constant 1.162800e+02 : f32
    %47 = vector.broadcast %cst_26 : f32 to vector<32x16xf32>
    %48 = arith.subf %34, %47 : vector<32x16xf32>
    %cst_27 = arith.constant 1.000000e+00 : f32
    %49 = vector.broadcast %cst_27 : f32 to vector<32x16xf32>
    %50 = arith.mulf %48, %49 : vector<32x16xf32>
    %cst_28 = arith.constant 0.000000e+00 : f32
    %51 = vector.shape_cast %5 : vector<32x1xi1> to vector<32x1xi1>
    %52 = vector.broadcast %51 : vector<32x1xi1> to vector<32x16xi1>
    %53 = vector.broadcast %cst_28 : f32 to vector<32x16xf32>
    %54 = arith.select %52, %50, %53 : vector<32x16xi1>, vector<32x16xf32>
    %55 = tpu.concatenate %54, %6 in 1 : vector<32x16xf32>, vector<32x16xf32> -> vector<32x32xf32>
    %c0_29 = arith.constant 0 : index
    %c1_30 = arith.constant 1 : index
    %c0_31 = arith.constant 0 : index
    %c0_32 = arith.constant 0 : index
    %56 = vector.load %arg4[%c0_29, %c1_30, %c0_31, %c0_32] : memref<1x3x32x32xf32, #tpu.memory_space<vmem>>, vector<1x1x32x32xf32>
    %57 = vector.shape_cast %56 : vector<1x1x32x32xf32> to vector<32x32xf32>
    %58 = vector.shape_cast %55 : vector<32x32xf32> to vector<1x1x32x32xf32>
    tpu.vector_store %arg4[%c0_29, %c1_30, %c0_31, %c0_32], %58 {strides = array<i32>} : memref<1x3x32x32xf32, #tpu.memory_space<vmem>>, vector<1x1x32x32xf32>,
    %c0_33 = arith.constant 0 : index
    %c2_34 = arith.constant 2 : index
    %c0_35 = arith.constant 0 : index
    %c0_36 = arith.constant 0 : index
    %59 = vector.load %arg2[%c0_33, %c2_34, %c0_35, %c0_36] : memref<1x3x32x16xf32, #tpu.memory_space<vmem>>, vector<1x1x32x16xf32>
    %60 = vector.shape_cast %59 : vector<1x1x32x16xf32> to vector<32x16xf32>
    %cst_37 = arith.constant 1.035300e+02 : f32
    %61 = vector.broadcast %cst_37 : f32 to vector<32x16xf32>
    %62 = arith.subf %60, %61 : vector<32x16xf32>
    %cst_38 = arith.constant 0.0174291935 : f32
    %63 = vector.broadcast %cst_38 : f32 to vector<32x16xf32>
    %64 = arith.mulf %62, %63 : vector<32x16xf32>
    %cst_39 = arith.constant 0.000000e+00 : f32
    %65 = vector.shape_cast %5 : vector<32x1xi1> to vector<32x1xi1>
    %66 = vector.broadcast %65 : vector<32x1xi1> to vector<32x16xi1>
    %67 = vector.broadcast %cst_39 : f32 to vector<32x16xf32>
    %68 = arith.select %66, %64, %67 : vector<32x16xi1>, vector<32x16xf32>
    %69 = tpu.concatenate %68, %6 in 1 : vector<32x16xf32>, vector<32x16xf32> -> vector<32x32xf32>
    %c0_40 = arith.constant 0 : index
    %c2_41 = arith.constant 2 : index
    %c0_42 = arith.constant 0 : index
    %c0_43 = arith.constant 0 : index
    %70 = vector.load %arg3[%c0_40, %c2_41, %c0_42, %c0_43] : memref<1x3x32x32xf32, #tpu.memory_space<vmem>>, vector<1x1x32x32xf32>
    %71 = vector.shape_cast %70 : vector<1x1x32x32xf32> to vector<32x32xf32>
    %72 = vector.shape_cast %69 : vector<32x32xf32> to vector<1x1x32x32xf32>
    tpu.vector_store %arg3[%c0_40, %c2_41, %c0_42, %c0_43], %72 {strides = array<i32>} : memref<1x3x32x32xf32, #tpu.memory_space<vmem>>, vector<1x1x32x32xf32>,
    %cst_44 = arith.constant 1.236750e+02 : f32
    %73 = vector.broadcast %cst_44 : f32 to vector<32x16xf32>
    %74 = arith.subf %60, %73 : vector<32x16xf32>
    %cst_45 = arith.constant 1.000000e+00 : f32
    %75 = vector.broadcast %cst_45 : f32 to vector<32x16xf32>
    %76 = arith.mulf %74, %75 : vector<32x16xf32>
    %cst_46 = arith.constant 0.000000e+00 : f32
    %77 = vector.shape_cast %5 : vector<32x1xi1> to vector<32x1xi1>
    %78 = vector.broadcast %77 : vector<32x1xi1> to vector<32x16xi1>
    %79 = vector.broadcast %cst_46 : f32 to vector<32x16xf32>
    %80 = arith.select %78, %76, %79 : vector<32x16xi1>, vector<32x16xf32>
    %81 = tpu.concatenate %80, %6 in 1 : vector<32x16xf32>, vector<32x16xf32> -> vector<32x32xf32>
    %c0_47 = arith.constant 0 : index
    %c0_48 = arith.constant 0 : index
    %c0_49 = arith.constant 0 : index
    %c0_50 = arith.constant 0 : index
    %82 = vector.load %arg4[%c0_47, %c0_48, %c0_49, %c0_50] : memref<1x3x32x32xf32, #tpu.memory_space<vmem>>, vector<1x1x32x32xf32>
    %83 = vector.shape_cast %82 : vector<1x1x32x32xf32> to vector<32x32xf32>
    %84 = vector.shape_cast %81 : vector<32x32xf32> to vector<1x1x32x32xf32>
    tpu.vector_store %arg4[%c0_47, %c0_48, %c0_49, %c0_50], %84 {strides = array<i32>} : memref<1x3x32x32xf32, #tpu.memory_space<vmem>>, vector<1x1x32x32xf32>,
    return
  }
  func.func @transform_0(%arg0: i32, %arg1: i32) -> (i32, i32, i32, i32) {
    %c0_i32 = arith.constant 0 : i32
    %0 = arith.minsi %arg1, %c0_i32 : i32
    %c0_i32_0 = arith.constant 0 : i32
    %c0_i32_1 = arith.constant 0 : i32
    %c0_i32_2 = arith.constant 0 : i32
    return %arg0, %c0_i32_0, %0, %c0_i32_1 : i32, i32, i32, i32
  }
  func.func @transform_1(%arg0: i32, %arg1: i32) -> (i32, i32, i32, i32) {
    %c0_i32 = arith.constant 0 : i32
    %c0_i32_0 = arith.constant 0 : i32
    %c0_i32_1 = arith.constant 0 : i32
    return %arg0, %c0_i32, %arg1, %c0_i32_0 : i32, i32, i32, i32
  }
  func.func @transform_2(%arg0: i32, %arg1: i32) -> (i32, i32, i32, i32) {
    %c0_i32 = arith.constant 0 : i32
    %c0_i32_0 = arith.constant 0 : i32
    %c0_i32_1 = arith.constant 0 : i32
    return %arg0, %c0_i32, %arg1, %c0_i32_0 : i32, i32, i32, i32
  }
}

</mosaic_0001>

<llo_original>
// kernel: tpu_custom_call.1
$region0: #{tpu_custom_call.1}
  #allocation0 [shape = 'u32[]', space=smem, size = 0x4, offset = 0x4, fixed_abs, tag = 'smem constant byte address 0x4 - core index']
  #allocation1 [shape = 'u32[144,128]{1,0:T(1,128)}', space=vmem, size = 0x12000, scoped, tag = 'internal scratch']
  #allocation8 [shape = 's32[]', space=sflag, size = 0x4, offset = 0, fixed_abs, tag = 'sflag constant byte address 0x0 - dummy sync flag']
  %s0 = inlined_call_operand.hbm [shape: f32[2,3,16,16], index: 0, kind: input, shape index: {}]
  %s1 = inlined_call_operand.hbm [shape: f32[2,3,32,32], index: 1, kind: output, shape index: {0}]
  %s2 = inlined_call_operand.hbm [shape: f32[2,3,32,32], index: 2, kind: output, shape index: {1}]
  %3 = xla_tuple %s1, %s2
  %s4 = sld [smem:[#allocation0]]
  $region49: #{tpu_custom_call.1} parent=0
    _
  %s6 = ssub.s32 1, %s4
  %s7 = scalar_select 0, %s6, %s4
  $region1: #{tpu_custom_call.1} parent=0
    #allocation2 [shape = 'u8[98304]{0}', space=vmem, size = 0x18000, scoped, tag = 'input window, operand 0']
    #allocation3 [shape = 's32[2]{0}', space=sflag, size = 0x8, scoped, tag = 'scoped memory for tpu_custom_call.1']
    #allocation4 [shape = 's32[2]{0}', space=sflag, size = 0x8, scoped, tag = 'scoped memory for tpu_custom_call.1']
    #allocation5 [shape = 'u8[98304]{0}', space=vmem, size = 0x18000, scoped, tag = 'output window, operand 0']
    #allocation6 [shape = 'u8[98304]{0}', space=vmem, size = 0x18000, scoped, tag = 'output window, operand 1']
    #allocation7 [shape = 's32[2]{0}', space=sflag, size = 0x8, scoped, tag = 'scoped memory for tpu_custom_call.1']
    %8 = vsyncpa [#allocation3], 0
    %s9 = scalar_lea.sflag [#allocation3], 1
    %10 = vsyncpa %s9, 0
    %11 = vsyncpa [#allocation4], 0
    %s12 = scalar_lea.sflag [#allocation4], 1
    %13 = vsyncpa %s12, 0
    %14 = vsyncpa [#allocation7], 0
    %s15 = scalar_lea.sflag [#allocation7], 1
    %16 = vsyncpa %s15, 0
    loop: start=0, step=1, limit=4
    $region2: #{tpu_custom_call.1} parent=1 // loop_pre_header
      _
    $region3: #{tpu_custom_call.1} parent=1 // loop_header
      %s18 = sphi 0, %s22
      %p19 = scmp.ge.s32.totalorder %s18, 4
      %s25 = sphi 0, %s37
      %s26 = sphi 0, %s33
      %s27 = sphi 0, %s25
      %s28 = sphi 0, %s26
      %s29 = sphi 0, %s27
      %s30 = sphi 0, %s28
      %s46 = sphi 0, %s48
      %s49 = sphi 0, %s46
      %s50 = sphi 0, %s49
      %s66 = sphi 0, %s50
      %s74 = sphi 0, %s76
      %s77 = sphi 0, %s74
      %s78 = sphi 0, %s77
      %s94 = sphi 0, %s78
      %s102 = sphi 0, %s104
      %s105 = sphi 0, %s102
      %s106 = sphi 0, %s105
      %s122 = sphi 0, %s106
    $region4: #{tpu_custom_call.1} parent=1 // loop_header_branch
      %21 = sbr.rel (%p19) target = $region8
    $region5: #{tpu_custom_call.1} parent=1 // loop_body
      %s23 = ssub.s32 %s18, 1
      %s24 = ssub.s32 %s18, 2
      %s31 = sadd.s32 1, %s26
      %p32 = scmp.ge.s32.totalorder %s31, 1
      %s33 = scalar_select %p32, 0, %s31
      %s34 = sadd.s32 1, %s25
      %s35 = scalar_select %p32, %s34, %s25
      %p36 = scmp.ge.s32.totalorder %s35, 2
      %s37 = scalar_select %p36, 0, %s35
      %p38 = scmp.lt.s32.totalorder %s26, 0
      %s39 = scalar_select %p38, %s26, 0
      %p40 = scmp.lt.s32.totalorder %s33, 0
      %s41 = scalar_select %p40, %s33, 0
      %s42 = ssub.s32 %s25, %s37
      %s43 = ssub.s32 %s39, %s41
      %s44 = sor.u32 %s42, %s43
      %p45 = scmp.eq.s32.totalorder %s44, 0
      %s47 = sadd.s32 %s46, 1
      %s48 = scalar_select %p45, %s46, %s47
      %p51 = pneg %p45
      %p52 = scmp.eq.s32.totalorder %s18, 1
      %p53 = por %p51, %p52
      %p54 = scmp.ne.s32.totalorder %s46, %s49
      %p55 = scmp.eq.s32.totalorder %s18, 0
      %p56 = por %p54, %p55
      %p57 = scmp.ne.s32.totalorder %s46, %s49
      %p58 = scmp.eq.s32.totalorder %s23, 1
      %p59 = por %p57, %p58
      %p60 = scmp.ne.s32.totalorder %s49, %s50
      %p61 = scmp.eq.s32.totalorder %s23, 0
      %p62 = por %p60, %p61
      %p63 = scmp.ne.s32.totalorder %s49, %s50
      %p64 = scmp.eq.s32.totalorder %s24, 1
      %p65 = por %p63, %p64
      %p67 = scmp.ne.s32.totalorder %s50, %s66
      %p68 = scmp.eq.s32.totalorder %s24, 0
      %p69 = por %p67, %p68
      %s70 = ssub.s32 %s25, %s37
      %s71 = ssub.s32 %s26, %s33
      %s72 = sor.u32 %s70, %s71
      %p73 = scmp.eq.s32.totalorder %s72, 0
      %s75 = sadd.s32 %s74, 1
      %s76 = scalar_select %p73, %s74, %s75
      %p79 = pneg %p73
      %p80 = scmp.eq.s32.totalorder %s18, 1
      %p81 = por %p79, %p80
      %p82 = scmp.ne.s32.totalorder %s74, %s77
      %p83 = scmp.eq.s32.totalorder %s18, 0
      %p84 = por %p82, %p83
      %p85 = scmp.ne.s32.totalorder %s74, %s77
      %p86 = scmp.eq.s32.totalorder %s23, 1
      %p87 = por %p85, %p86
      %p88 = scmp.ne.s32.totalorder %s77, %s78
      %p89 = scmp.eq.s32.totalorder %s23, 0
      %p90 = por %p88, %p89
      %p91 = scmp.ne.s32.totalorder %s77, %s78
      %p92 = scmp.eq.s32.totalorder %s24, 1
      %p93 = por %p91, %p92
      %p95 = scmp.ne.s32.totalorder %s78, %s94
      %p96 = scmp.eq.s32.totalorder %s24, 0
      %p97 = por %p95, %p96
      %s98 = ssub.s32 %s25, %s37
      %s99 = ssub.s32 %s26, %s33
      %s100 = sor.u32 %s98, %s99
      %p101 = scmp.eq.s32.totalorder %s100, 0
      %s103 = sadd.s32 %s102, 1
      %s104 = scalar_select %p101, %s102, %s103
      %p107 = pneg %p101
      %p108 = scmp.eq.s32.totalorder %s18, 1
      %p109 = por %p107, %p108
      %p110 = scmp.ne.s32.totalorder %s102, %s105
      %p111 = scmp.eq.s32.totalorder %s18, 0
      %p112 = por %p110, %p111
      %p113 = scmp.ne.s32.totalorder %s102, %s105
      %p114 = scmp.eq.s32.totalorder %s23, 1
      %p115 = por %p113, %p114
      %p116 = scmp.ne.s32.totalorder %s105, %s106
      %p117 = scmp.eq.s32.totalorder %s23, 0
      %p118 = por %p116, %p117
      %p119 = scmp.ne.s32.totalorder %s105, %s106
      %p120 = scmp.eq.s32.totalorder %s24, 1
      %p121 = por %p119, %p120
      %p123 = scmp.ne.s32.totalorder %s106, %s122
      %p124 = scmp.eq.s32.totalorder %s24, 0
      %p125 = por %p123, %p124
      %p126 = scmp.le.s32.totalorder 1, %s18
      %p127 = scmp.lt.s32.totalorder %s18, 3
      %p128 = pnand %p126, %p127
      %p129 = pneg %p128
      // Predicated region
      $region9: #{tpu_custom_call.1} parent=5 // pred_check
        _
      $region10: #{tpu_custom_call.1} parent=5 // pred_check_branch
        %131 = sbr.rel (%p128) target = $region12
      $region11: #{tpu_custom_call.1} parent=5 // pred_region
        %s132 = ssub.s32 %s18, 1
      $region12: #{tpu_custom_call.1} parent=5 // pred_fallthru
        _
      %p133 = scmp.lt.s32.totalorder %s18, 2
      // Predicated region
      $region13: #{tpu_custom_call.1} parent=5 // pred_check
        %p134 = pneg %p133
      $region14: #{tpu_custom_call.1} parent=5 // pred_check_branch
        %136 = sbr.rel (%p134) target = $region16
      $region15: #{tpu_custom_call.1} parent=5 // pred_region
        // Predicated region
        $region17: #{tpu_custom_call.1} parent=15 // pred_check
          %p137 = pneg %p56
        $region18: #{tpu_custom_call.1} parent=15 // pred_check_branch
          %139 = sbr.rel (%p137) target = $region20
        $region19: #{tpu_custom_call.1} parent=15 // pred_region
          #allocation9 [shape = 'u32[6]{0}', space=smem, size = 0x18, scoped, tag = 'DMA stride descriptor']
          %s140 = sand.u32 %s46, 1
          %s141 = scalar_lea.sflag [#allocation3], %s140
          %s142 = sand.u32 %s46, 1
          %s143 = smul.addr %s142, 96
          %s144 = scalar_lea.vmem [#allocation2], %s143
          %p145 = scmp.lt.s32.totalorder %s26, 0
          %s146 = scalar_select %p145, %s26, 0
          %s147 = smul.u32 4, %s146
          %s148 = ssub.s32 2, %s147
          %s149 = smul.u32 384, %s148
          %s151 = ssub.s32 1536, %s149
          %152 = vsyncadd %s141, %s151
          %p153 = scmp.ne.s32.totalorder 0, %s149
          %s154 = smul.addr %s25, 6
          %s155 = sadd.s32 %s147, %s154
          %s156 = smul.addr %s155, 128
          %s157 = scalar_lea.hbm %s0, %s156
          %s158 = smul.u32 8, %s148
          %s159 = smul.u32 %s158, 3
          %s161 = sshll.u32 1, 14
          %s162 = sxor.u32 4294967295, %s161
          %s164 = sld [smem:[#allocation0]]
          %s165 = sadd.s32 2, %s164
          %s167 = sshll.u32 7, 26
          %s168 = sxor.u32 4294967295, %s167
          %s169 = sand.u32 0, %s168
          %s170 = sshll.u32 %s165, 26
          %s171 = sor.u32 %s169, %s170
          %s172 = sshll.u32 %s144, 4
          %s173 = int_to_ptr.vmem [resolvable:$true] %s172
          %s174 = sshll.u32 %s159, 4
          %179 = sst [smem:[#allocation9]] 256
          %s180 = scalar_lea.smem [#allocation9], 1
          %181 = sst [smem:[%s180]] 512
          %s182 = scalar_lea.smem [#allocation9], 2
          %183 = sst [smem:[%s182]] %s148
          %s184 = scalar_lea.smem [#allocation9], 3
          %185 = sst [smem:[%s184]] 128
          %s186 = scalar_lea.smem [#allocation9], 4
          %187 = sst [smem:[%s186]] 128
          %s188 = scalar_lea.smem [#allocation9], 5
          %189 = sst [smem:[%s188]] 8
          %191 = dma.general (%p153), %s157, %s174, %s173, %s141, [#allocation8], [#allocation9], %s171, 0
        $region20: #{tpu_custom_call.1} parent=15 // pred_fallthru
          _
      $region16: #{tpu_custom_call.1} parent=5 // pred_fallthru
        _
      %p192 = scmp.le.s32.totalorder 1, %s18
      %p193 = scmp.lt.s32.totalorder %s18, 3
      %p194 = pnand %p192, %p193
      %p195 = pneg %p194
      // Predicated region
      $region21: #{tpu_custom_call.1} parent=5 // pred_check
        _
      $region22: #{tpu_custom_call.1} parent=5 // pred_check_branch
        %197 = sbr.rel (%p194) target = $region24
      $region23: #{tpu_custom_call.1} parent=5 // pred_region
        %s198 = ssub.s32 %s18, 1
        %s199 = sand.u32 %s49, 1
        %s200 = scalar_lea.sflag [#allocation3], %s199
        %s201 = sand.u32 %s49, 1
        %s202 = smul.addr %s201, 96
        %s203 = scalar_lea.vmem [#allocation2], %s202
        // Predicated region
        $region25: #{tpu_custom_call.1} parent=23 // pred_check
          %p204 = pneg %p62
        $region26: #{tpu_custom_call.1} parent=23 // pred_check_branch
          %206 = sbr.rel (%p204) target = $region28
        $region27: #{tpu_custom_call.1} parent=23 // pred_region
          %207 = dma.done %s200, 1536
        $region28: #{tpu_custom_call.1} parent=23 // pred_fallthru
          _
        %s208 = sand.u32 %s49, 1
        %s209 = scalar_lea.sflag [#allocation3], %s208
        %s210 = sand.u32 %s49, 1
        %s211 = smul.addr %s210, 96
        %s212 = scalar_lea.vmem [#allocation2], %s211
        %p213 = pneg %p62
        %p214 = pneg %p59
        %p215 = pneg %p90
        %p216 = pneg %p87
        %s217 = sand.u32 %s77, 1
        %s218 = scalar_lea.sflag [#allocation4], %s217
        %s219 = sand.u32 %s77, 1
        %s220 = smul.addr %s219, 96
        %s221 = scalar_lea.vmem [#allocation5], %s220
        %p222 = pneg %p118
        %p223 = pneg %p115
        %s224 = sand.u32 %s105, 1
        %s225 = scalar_lea.sflag [#allocation7], %s224
        %s226 = sand.u32 %s105, 1
        %s227 = smul.addr %s226, 96
        %s228 = scalar_lea.vmem [#allocation6], %s227
        %p229 = scmp.lt.s32.totalorder %s28, 0
        %s230 = scalar_select %p229, %s28, 0
        %s231 = smul.u32 4, %s230
        %s232 = ssub.s32 2, %s231
        %s233 = smul.u32 384, %s232
        %s234 = smul.u32 4, %s28
        %s235 = smul.u32 4, %s28
        %s236 = smul.u32 %s28, 32
        %v237 = vlaneseq
        %v238 = vshrl.u32 %v237, 7
        %v239 = vadd.s32 %v238, 8
        %v240 = vadd.s32 %v238, 16
        %v241 = vadd.s32 %v238, 24
        %v242 = vstv %s236
        %v243 = vadd.s32 %v242, %v238
        %v244 = vadd.s32 %v242, %v239
        %v245 = vadd.s32 %v242, %v240
        %v246 = vadd.s32 %v242, %v241
        %vm247 = vcmp.lt.s32.totalorder %v243, 16
        %vm248 = vcmp.lt.s32.totalorder %v244, 16
        %vm249 = vcmp.lt.s32.totalorder %v245, 16
        %vm250 = vcmp.lt.s32.totalorder %v246, 16
        %v251 = vld [vmem:[%s203] sm:$0xff]
        %v252 = vld [vmem:[%s203 + $0x8] sm:$0xff]
        %v253 = vld [vmem:[%s203 + $0x10] sm:$0xff]
        %v254 = vld [vmem:[%s203 + $0x18] sm:$0xff]
        %v255 = vsub.f32 %v251, 123.675
        %v256 = vsub.f32 %v252, 123.675
        %v257 = vsub.f32 %v253, 123.675
        %v258 = vsub.f32 %v254, 123.675
        %v259 = vmul.f32 %v255, 0.017124753
        %v260 = vmul.f32 %v256, 0.017124753
        %v261 = vmul.f32 %v257, 0.017124753
        %v262 = vmul.f32 %v258, 0.017124753
        %v263 = vsel %vm247, 1, 0
        %v264 = vsel %vm248, 1, 0
        %v265 = vsel %vm249, 1, 0
        %v266 = vsel %vm250, 1, 0
        %vm267 = vcmp.eq.s32.totalorder %v263, 1
        %vm268 = vcmp.eq.s32.totalorder %v264, 1
        %vm269 = vcmp.eq.s32.totalorder %v265, 1
        %vm270 = vcmp.eq.s32.totalorder %v266, 1
        %v271 = vsel %vm267, %v259, 0.0
        %v272 = vsel %vm268, %v260, 0.0
        %v273 = vsel %vm269, %v261, 0.0
        %v274 = vsel %vm270, %v262, 0.0
        %vm275 = vcmask 130048
        %v276 = vsel %vm275, %v271, 0.0
        %v277 = vsel %vm275, %v272, 0.0
        %v278 = vsel %vm275, %v273, 0.0
        %v279 = vsel %vm275, %v274, 0.0
        %vm280 = vcmask 261120
        %281 = vst.msk [vmem:[%s221] sm:$0xff] %vm280, %v276
        %282 = vst.msk [vmem:[%s221 + $0x8] sm:$0xff] %vm280, %v277
        %283 = vst.msk [vmem:[%s221 + $0x10] sm:$0xff] %vm280, %v278
        %284 = vst.msk [vmem:[%s221 + $0x18] sm:$0xff] %vm280, %v279
        %v285 = vsub.f32 %v251, 103.53
        %v286 = vsub.f32 %v252, 103.53
        %v287 = vsub.f32 %v253, 103.53
        %v288 = vsub.f32 %v254, 103.53
        %v289 = vsel %vm267, %v285, 0.0
        %v290 = vsel %vm268, %v286, 0.0
        %v291 = vsel %vm269, %v287, 0.0
        %v292 = vsel %vm270, %v288, 0.0
        %v293 = vsel %vm275, %v289, 0.0
        %v294 = vsel %vm275, %v290, 0.0
        %v295 = vsel %vm275, %v291, 0.0
        %v296 = vsel %vm275, %v292, 0.0
        %s297 = scalar_lea.vmem %s228, 64 [#allocation6]
        %298 = vst.msk [vmem:[%s297] sm:$0xff] %vm280, %v293
        %299 = vst.msk [vmem:[%s297 + $0x8] sm:$0xff] %vm280, %v294
        %300 = vst.msk [vmem:[%s297 + $0x10] sm:$0xff] %vm280, %v295
        %301 = vst.msk [vmem:[%s297 + $0x18] sm:$0xff] %vm280, %v296
        %s302 = scalar_lea.vmem %s203, 32 [#allocation2]
        %v303 = vld [vmem:[%s302] sm:$0xff]
        %v304 = vld [vmem:[%s302 + $0x8] sm:$0xff]
        %v305 = vld [vmem:[%s302 + $0x10] sm:$0xff]
        %v306 = vld [vmem:[%s302 + $0x18] sm:$0xff]
        %v307 = vsub.f32 %v303, 116.28
        %v308 = vsub.f32 %v304, 116.28
        %v309 = vsub.f32 %v305, 116.28
        %v310 = vsub.f32 %v306, 116.28
        %v311 = vmul.f32 %v307, 0.017507004
        %v312 = vmul.f32 %v308, 0.017507004
        %v313 = vmul.f32 %v309, 0.017507004
        %v314 = vmul.f32 %v310, 0.017507004
        %v315 = vsel %vm267, %v311, 0.0
        %v316 = vsel %vm268, %v312, 0.0
        %v317 = vsel %vm269, %v313, 0.0
        %v318 = vsel %vm270, %v314, 0.0
        %v319 = vsel %vm275, %v315, 0.0
        %v320 = vsel %vm275, %v316, 0.0
        %v321 = vsel %vm275, %v317, 0.0
        %v322 = vsel %vm275, %v318, 0.0
        %s323 = scalar_lea.vmem %s221, 32 [#allocation5]
        %324 = vst.msk [vmem:[%s323] sm:$0xff] %vm280, %v319
        %325 = vst.msk [vmem:[%s323 + $0x8] sm:$0xff] %vm280, %v320
        %326 = vst.msk [vmem:[%s323 + $0x10] sm:$0xff] %vm280, %v321
        %327 = vst.msk [vmem:[%s323 + $0x18] sm:$0xff] %vm280, %v322
        %v328 = vsel %vm267, %v307, 0.0
        %v329 = vsel %vm268, %v308, 0.0
        %v330 = vsel %vm269, %v309, 0.0
        %v331 = vsel %vm270, %v310, 0.0
        %v332 = vsel %vm275, %v328, 0.0
        %v333 = vsel %vm275, %v329, 0.0
        %v334 = vsel %vm275, %v330, 0.0
        %v335 = vsel %vm275, %v331, 0.0
        %s336 = scalar_lea.vmem %s228, 32 [#allocation6]
        %337 = vst.msk [vmem:[%s336] sm:$0xff] %vm280, %v332
        %338 = vst.msk [vmem:[%s336 + $0x8] sm:$0xff] %vm280, %v333
        %339 = vst.msk [vmem:[%s336 + $0x10] sm:$0xff] %vm280, %v334
        %340 = vst.msk [vmem:[%s336 + $0x18] sm:$0xff] %vm280, %v335
        %s341 = scalar_lea.vmem %s203, 64 [#allocation2]
        %v342 = vld [vmem:[%s341] sm:$0xff]
        %v343 = vld [vmem:[%s341 + $0x8] sm:$0xff]
        %v344 = vld [vmem:[%s341 + $0x10] sm:$0xff]
        %v345 = vld [vmem:[%s341 + $0x18] sm:$0xff]
        %v346 = vsub.f32 %v342, 103.53
        %v347 = vsub.f32 %v343, 103.53
        %v348 = vsub.f32 %v344, 103.53
        %v349 = vsub.f32 %v345, 103.53
        %v350 = vmul.f32 %v346, 0.017429193
        %v351 = vmul.f32 %v347, 0.017429193
        %v352 = vmul.f32 %v348, 0.017429193
        %v353 = vmul.f32 %v349, 0.017429193
        %v354 = vsel %vm267, %v350, 0.0
        %v355 = vsel %vm268, %v351, 0.0
        %v356 = vsel %vm269, %v352, 0.0
        %v357 = vsel %vm270, %v353, 0.0
        %v358 = vsel %vm275, %v354, 0.0
        %v359 = vsel %vm275, %v355, 0.0
        %v360 = vsel %vm275, %v356, 0.0
        %v361 = vsel %vm275, %v357, 0.0
        %s362 = scalar_lea.vmem %s221, 64 [#allocation5]
        %363 = vst.msk [vmem:[%s362] sm:$0xff] %vm280, %v358
        %364 = vst.msk [vmem:[%s362 + $0x8] sm:$0xff] %vm280, %v359
        %365 = vst.msk [vmem:[%s362 + $0x10] sm:$0xff] %vm280, %v360
        %366 = vst.msk [vmem:[%s362 + $0x18] sm:$0xff] %vm280, %v361
        %v367 = vsub.f32 %v342, 123.675
        %v368 = vsub.f32 %v343, 123.675
        %v369 = vsub.f32 %v344, 123.675
        %v370 = vsub.f32 %v345, 123.675
        %v371 = vsel %vm267, %v367, 0.0
        %v372 = vsel %vm268, %v368, 0.0
        %v373 = vsel %vm269, %v369, 0.0
        %v374 = vsel %vm270, %v370, 0.0
        %v375 = vsel %vm275, %v371, 0.0
        %v376 = vsel %vm275, %v372, 0.0
        %v377 = vsel %vm275, %v373, 0.0
        %v378 = vsel %vm275, %v374, 0.0
        %379 = vst.msk [vmem:[%s228] sm:$0xff] %vm280, %v375
        %380 = vst.msk [vmem:[%s228 + $0x8] sm:$0xff] %vm280, %v376
        %381 = vst.msk [vmem:[%s228 + $0x10] sm:$0xff] %vm280, %v377
        %382 = vst.msk [vmem:[%s228 + $0x18] sm:$0xff] %vm280, %v378
        %s383 = sand.u32 %s77, 1
        %s384 = scalar_lea.sflag [#allocation4], %s383
        %s385 = sand.u32 %s77, 1
        %s386 = smul.addr %s385, 96
        %s387 = scalar_lea.vmem [#allocation5], %s386
        %s388 = sand.u32 %s105, 1
        %s389 = scalar_lea.sflag [#allocation7], %s388
        %s390 = sand.u32 %s105, 1
        %s391 = smul.addr %s390, 96
        %s392 = scalar_lea.vmem [#allocation6], %s391
        // Predicated region
        $region29: #{tpu_custom_call.1} parent=23 // pred_check
          %p393 = pneg %p87
        $region30: #{tpu_custom_call.1} parent=23 // pred_check_branch
          %395 = sbr.rel (%p393) target = $region32
        $region31: #{tpu_custom_call.1} parent=23 // pred_region
          %s396 = smul.u32 4, %s28
          %s398 = ssub.s32 1536, 1536
          %399 = vsyncadd %s384, %s398
          %s400 = smul.addr %s27, 12
          %s401 = sadd.s32 %s396, %s400
          %s402 = smul.addr %s401, 128
          %s403 = scalar_lea.hbm %s1, %s402
          %s404 = sshll.u32 %s387, 4
          %s405 = int_to_ptr.vmem [resolvable:$true] %s404
          %410 = dma.vmem_to_hbm [thread:$0]  %s405, 1536, %s403, %s384, 128, 128, 8
        $region32: #{tpu_custom_call.1} parent=23 // pred_fallthru
          _
        // Predicated region
        $region33: #{tpu_custom_call.1} parent=23 // pred_check
          %p411 = pneg %p115
        $region34: #{tpu_custom_call.1} parent=23 // pred_check_branch
          %413 = sbr.rel (%p411) target = $region36
        $region35: #{tpu_custom_call.1} parent=23 // pred_region
          %s414 = smul.u32 4, %s28
          %s416 = ssub.s32 1536, 1536
          %417 = vsyncadd %s389, %s416
          %s418 = smul.addr %s27, 12
          %s419 = sadd.s32 %s414, %s418
          %s420 = smul.addr %s419, 128
          %s421 = scalar_lea.hbm %s2, %s420
          %s422 = sshll.u32 %s392, 4
          %s423 = int_to_ptr.vmem [resolvable:$true] %s422
          %428 = dma.vmem_to_hbm [thread:$0]  %s423, 1536, %s421, %s389, 128, 128, 8
        $region36: #{tpu_custom_call.1} parent=23 // pred_fallthru
          _
      $region24: #{tpu_custom_call.1} parent=5 // pred_fallthru
        _
      %p429 = scmp.le.s32.totalorder 2, %s18
      // Predicated region
      $region37: #{tpu_custom_call.1} parent=5 // pred_check
        %p430 = pneg %p429
      $region38: #{tpu_custom_call.1} parent=5 // pred_check_branch
        %432 = sbr.rel (%p430) target = $region40
      $region39: #{tpu_custom_call.1} parent=5 // pred_region
        %s433 = ssub.s32 %s18, 2
        // Predicated region
        $region41: #{tpu_custom_call.1} parent=39 // pred_check
          %p434 = pneg %p93
        $region42: #{tpu_custom_call.1} parent=39 // pred_check_branch
          %436 = sbr.rel (%p434) target = $region44
        $region43: #{tpu_custom_call.1} parent=39 // pred_region
          %s437 = sand.u32 %s78, 1
          %s438 = scalar_lea.sflag [#allocation4], %s437
          %s439 = sand.u32 %s78, 1
          %s440 = smul.addr %s439, 96
          %s441 = scalar_lea.vmem [#allocation5], %s440
          %442 = dma.done %s438, 1536
        $region44: #{tpu_custom_call.1} parent=39 // pred_fallthru
          _
        // Predicated region
        $region45: #{tpu_custom_call.1} parent=39 // pred_check
          %p443 = pneg %p121
        $region46: #{tpu_custom_call.1} parent=39 // pred_check_branch
          %445 = sbr.rel (%p443) target = $region48
        $region47: #{tpu_custom_call.1} parent=39 // pred_region
          %s446 = sand.u32 %s106, 1
          %s447 = scalar_lea.sflag [#allocation7], %s446
          %s448 = sand.u32 %s106, 1
          %s449 = smul.addr %s448, 96
          %s450 = scalar_lea.vmem [#allocation6], %s449
          %451 = dma.done %s447, 1536
        $region48: #{tpu_custom_call.1} parent=39 // pred_fallthru
          _
      $region40: #{tpu_custom_call.1} parent=5 // pred_fallthru
        _
    $region6: #{tpu_custom_call.1} parent=1 // loop_footer
      %s22 = sadd.s32 1, %s18
    $region7: #{tpu_custom_call.1} parent=1 // loop_footer_branch
      %17 = sbr.rel target = $region3
    $region8: #{tpu_custom_call.1} parent=1 // loop_exit
      _
    %452 = vsyncpa [#allocation3], 1
    %s453 = scalar_lea.sflag [#allocation3], 1
    %454 = vsyncpa %s453, 1
    %455 = vsyncpa [#allocation4], 1
    %s456 = scalar_lea.sflag [#allocation4], 1
    %457 = vsyncpa %s456, 1
    %458 = vsyncpa [#allocation7], 1
    %s459 = scalar_lea.sflag [#allocation7], 1
    %460 = vsyncpa %s459, 1

</llo_original>
